<compile_context>
chip_gen: v7x
topology: tpu7x:2x2x1
jax: 0.10.0
libtpu: 0.0.40
codegen_flags: <defaults>
</compile_context>

<pallas_src>
import functools

import numpy as np
import jax
import jax.numpy as jnp
from jax.experimental import pallas as pl
from jax.experimental.pallas import tpu as pltpu

UNDEFINED_INF = 1000000.0

_LANES = 128                           # vreg lane width
_TARGET_BLOCK_BYTES = 2 * 1024 * 1024  # per-input block (2 in x 2 buf = 8 MiB VMEM)
_NUM_SPLITS = 2                        # leading "parallel" axis (v7x dual TC)


def _round_up(x, m):
    return ((x + m - 1) // m) * m


def _modified_mse_kernel(out_ref, tgt_ref, acc_ref, *,
                         n_valid, rows, inner, total_blocks, mask_last):
    """Accumulate sum(masked_diff^2) of one (rows, 128) tile into acc_ref.

    out_ref, tgt_ref: (rows, _LANES) input tiles (native dtype, cast here).
    acc_ref: (1, 8, _LANES) f32 OUTPUT block; same block index for every inner
             step -> stays resident in VMEM and acts as the accumulator.
    """
    s = pl.program_id(0)               # split ("parallel") index
    j = pl.program_id(1)               # inner ("arbitrary" / reduction) index
    blk = s * inner + j                # logical block index (may be phantom)

    @pl.when(j == 0)
    def _():
        acc_ref[...] = jnp.zeros_like(acc_ref)

    out = out_ref[...].astype(jnp.float32)
    tgt = tgt_ref[...].astype(jnp.float32)
    # clamp(max=1e6) followed by zeroing "== 1e6" entries  <=>  zero where >= 1e6.
    diff = jnp.where(tgt >= UNDEFINED_INF, 0.0, out - tgt)
    sq = diff * diff

    def _accumulate(vals):
        # Row-reduce the (rows, 128) tile onto the (8, 128) accumulator using
        # a layout-preserving reshape + vreg-wise VPU adds (no XLU per step).
        acc_ref[0] += jnp.sum(vals.reshape(rows // 8, 8, _LANES), axis=0)

    if mask_last:
        # Interior (fully valid) tiles: no iota / masking work at all.
        @pl.when(blk < total_blocks - 1)
        def _():
            _accumulate(sq)

        # Final real tile: mask out elements past the end of the real data.
        # NOTE: int32 flat index -> valid for n < 2**31 elements.
        @pl.when(blk == total_blocks - 1)
        def _():
            row_ids = jax.lax.broadcasted_iota(jnp.int32, (rows, _LANES), 0)
            col_ids = jax.lax.broadcasted_iota(jnp.int32, (rows, _LANES), 1)
            flat = (blk * rows + row_ids) * _LANES + col_ids
            _accumulate(jnp.where(flat < n_valid, sq, 0.0))
    else:
        # Phantom steps of a ragged split (blk >= total_blocks): contribute 0.
        @pl.when(blk < total_blocks)
        def _():
            _accumulate(sq)


@jax.jit
def modified_mse_loss(output, target):
    """output, target: same shape (e.g. (N,) or (N, 1)). Returns scalar f32."""
    assert output.shape == target.shape
    out_v = output.reshape(-1)
    tgt_v = target.reshape(-1)
    n = out_v.shape[0]
    assert n > 0

    # Keep f32 / bf16 native (cast happens inside the kernel); promote anything
    # else to f32 up front.
    dt = jnp.promote_types(out_v.dtype, tgt_v.dtype)
    if dt not in (np.dtype(jnp.float32), np.dtype(jnp.bfloat16)):
        dt = np.dtype(jnp.float32)
    out_v = out_v.astype(dt)
    tgt_v = tgt_v.astype(dt)

    itemsize = np.dtype(dt).itemsize
    sub = 32 // itemsize                  # sublane tile: 8 (f32) / 16 (bf16)
    align = sub * _LANES

    # Pad only up to the (sub, 128) tile boundary required for the free
    # 1-D -> 2-D reshape; block-count raggedness is handled inside the kernel.
    # TODO(synk): for huge ragged N, process the aligned prefix in the kernel
    # and the small (<align) tail in plain JAX to avoid this full-copy pad.
    n_pad = _round_up(n, align)
    if n_pad != n:
        out_v = jnp.pad(out_v, (0, n_pad - n))
        tgt_v = jnp.pad(tgt_v, (0, n_pad - n))

    rows_total = n_pad // _LANES
    max_rows = _TARGET_BLOCK_BYTES // (_LANES * itemsize)   # 4096 f32 / 8192 bf16
    rows = min(max_rows, rows_total)                        # multiple of sub
    total_blocks = pl.cdiv(rows_total, rows)
    num_splits = _NUM_SPLITS if total_blocks >= _NUM_SPLITS else 1
    inner = pl.cdiv(total_blocks, num_splits)
    # Garbage rows only exist when the last block hangs past rows_total
    # (padded elements are zeros and contribute nothing either way).
    mask_last = (total_blocks * rows != rows_total)

    out2 = out_v.reshape(rows_total, _LANES)   # free row-major reinterpretation
    tgt2 = tgt_v.reshape(rows_total, _LANES)

    kernel = functools.partial(
        _modified_mse_kernel, n_valid=n, rows=rows, inner=inner,
        total_blocks=total_blocks, mask_last=mask_last)

    def in_map(s, j):
        # Clamp phantom block indices of a ragged split to the last real block;
        # the kernel skips their contribution entirely.
        return (jnp.minimum(s * inner + j, total_blocks - 1), 0)

    partials = pl.pallas_call(
        kernel,
        out_shape=jax.ShapeDtypeStruct((num_splits, 8, _LANES), jnp.float32),
        grid_spec=pltpu.PrefetchScalarGridSpec(
            num_scalar_prefetch=0,
            grid=(num_splits, inner),
            in_specs=[
                pl.BlockSpec((rows, _LANES), in_map),
                pl.BlockSpec((rows, _LANES), in_map),
            ],
            out_specs=pl.BlockSpec((1, 8, _LANES), lambda s, j: (s, 0, 0)),
        ),
        compiler_params=pltpu.CompilerParams(
            dimension_semantics=("parallel", "arbitrary")),
        cost_estimate=pl.CostEstimate(
            flops=3 * n, transcendentals=0,
            bytes_accessed=2 * n_pad * itemsize + num_splits * 8 * _LANES * 4),
    )(out2, tgt2)

    # Tiny final reduction + mean normalization (1/N as a constant multiply).
    return jnp.sum(partials) * jnp.float32(1.0 / n)


def _reference(output, target):
    o = output.reshape(-1).astype(jnp.float32)
    t = jnp.minimum(target.reshape(-1).astype(jnp.float32), UNDEFINED_INF)
    undef = t == UNDEFINED_INF
    return jnp.mean(jnp.where(undef, 0.0, o - t) ** 2)


if __name__ == "__main__":
    key = jax.random.PRNGKey(0)
    k1, k2, k3, k4 = jax.random.split(key, 4)

    # Module docstring: output / target are (N, 1) variables.
    N = 100
    output = jax.random.normal(k1, (N, 1), dtype=jnp.float32)
    target = jax.random.normal(k2, (N, 1), dtype=jnp.float32) * 2.0
    inf_idx = jax.random.choice(k3, N, shape=(7,), replace=False)
    target = target.at[inf_idx, 0].set(5.0e6)                 # "undefined"
    target = target.at[0, 0].set(float(UNDEFINED_INF))        # exactly 1e6 too

    loss = modified_mse_loss(output, target)
    jax.block_until_ready(loss)
    ref = _reference(output, target)
    assert jnp.allclose(loss, ref, rtol=1e-5, atol=1e-6), (loss, ref)

    # Larger ragged 1-D case: multiple blocks, 2-way split, phantom step and a
    # masked partial edge block.
    N2 = 1_300_003
    o2 = jax.random.normal(k1, (N2,), dtype=jnp.float32)
    t2 = jax.random.normal(k2, (N2,), dtype=jnp.float32)
    t2 = t2.at[::97].set(2.0e6)
    l2 = modified_mse_loss(o2, t2)
    jax.block_until_ready(l2)
    r2 = _reference(o2, t2)
    assert jnp.allclose(l2, r2, rtol=1e-4, atol=1e-6), (l2, r2)

    # bf16 inputs fed natively to the kernel (cast to f32 inside the kernel).
    N3 = 4096
    o3 = jax.random.normal(k1, (N3,), dtype=jnp.bfloat16)
    t3 = jax.random.normal(k4, (N3,), dtype=jnp.bfloat16)
    t3 = t3.at[::31].set(2.0e6)
    l3 = modified_mse_loss(o3, t3)
    jax.block_until_ready(l3)
    r3 = _reference(o3, t3)
    assert jnp.allclose(l3, r3, rtol=1e-4, atol=1e-5), (l3, r3)

    print("KERNEL_OK")
</pallas_src>

<mosaic_0001>
module attributes {stable_mosaic.version = 11 : i64} {
  func.func @_modified_mse_kernel(%arg0: i32, %arg1: i32, %arg2: memref<8x128xf32, #tpu.memory_space<vmem>>, %arg3: memref<8x128xf32, #tpu.memory_space<vmem>>, %arg4: memref<1x8x128xf32, #tpu.memory_space<vmem>>) attributes {dimension_semantics = [#tpu.dimension_semantics<parallel>, #tpu.dimension_semantics<arbitrary>], iteration_bounds = array<i64: 1, 1>, scalar_prefetch = 0 : i64, scratch_operands = 0 : i64, tpu.core_type = #tpu.core_type<tc>, window_params = [{transform_indices = @transform_0, window_bounds = array<i64: 8, 128>}, {transform_indices = @transform_1, window_bounds = array<i64: 8, 128>}, {transform_indices = @transform_2, window_bounds = array<i64: 1, 8, 128>}]} {
    %c1_i32 = arith.constant 1 : i32
    %0 = arith.muli %arg0, %c1_i32 : i32
    %1 = arith.addi %0, %arg1 : i32
    %c0_i32 = arith.constant 0 : i32
    %2 = arith.cmpi eq, %arg1, %c0_i32 : i32
    %3 = arith.extui %2 : i1 to i32
    %c0_i32_0 = arith.constant 0 : i32
    %4 = arith.cmpi ne, %3, %c0_i32_0 : i32
    scf.if %4 {
      %cst_7 = arith.constant 0.000000e+00 : f32
      %16 = vector.broadcast %cst_7 : f32 to vector<1x8x128xf32>
      %c0_8 = arith.constant 0 : index
      %c0_9 = arith.constant 0 : index
      %c0_10 = arith.constant 0 : index
      %17 = vector.load %arg4[%c0_8, %c0_9, %c0_10] : memref<1x8x128xf32, #tpu.memory_space<vmem>>, vector<1x8x128xf32>
      tpu.vector_store %arg4[%c0_8, %c0_9, %c0_10], %16 {strides = array<i32>} : memref<1x8x128xf32, #tpu.memory_space<vmem>>, vector<1x8x128xf32>,
    } else {
    }
    %c0 = arith.constant 0 : index
    %c0_1 = arith.constant 0 : index
    %5 = vector.load %arg2[%c0, %c0_1] : memref<8x128xf32, #tpu.memory_space<vmem>>, vector<8x128xf32>
    %c0_2 = arith.constant 0 : index
    %c0_3 = arith.constant 0 : index
    %6 = vector.load %arg3[%c0_2, %c0_3] : memref<8x128xf32, #tpu.memory_space<vmem>>, vector<8x128xf32>
    %cst = arith.constant 1.000000e+06 : f32
    %7 = vector.broadcast %cst : f32 to vector<8x128xf32>
    %8 = arith.cmpf oge, %6, %7 : vector<8x128xf32>
    %9 = arith.subf %5, %6 : vector<8x128xf32>
    %cst_4 = arith.constant 0.000000e+00 : f32
    %10 = vector.broadcast %cst_4 : f32 to vector<8x128xf32>
    %11 = arith.select %8, %10, %9 : vector<8x128xi1>, vector<8x128xf32>
    %12 = arith.mulf %11, %11 : vector<8x128xf32>
    %c1_i32_5 = arith.constant 1 : i32
    %13 = arith.cmpi slt, %1, %c1_i32_5 : i32
    %14 = arith.extui %13 : i1 to i32
    %c0_i32_6 = arith.constant 0 : i32
    %15 = arith.cmpi ne, %14, %c0_i32_6 : i32
    scf.if %15 {
      %c0_7 = arith.constant 0 : index
      %c0_8 = arith.constant 0 : index
      %c0_9 = arith.constant 0 : index
      %16 = vector.load %arg4[%c0_7, %c0_8, %c0_9] : memref<1x8x128xf32, #tpu.memory_space<vmem>>, vector<1x8x128xf32>
      %17 = vector.shape_cast %16 : vector<1x8x128xf32> to vector<8x128xf32>
      %18 = vector.shape_cast %12 : vector<8x128xf32> to vector<1x8x128xf32>
      %cst_10 = arith.constant dense<0.000000e+00> : vector<8x128xf32>
      %19 = vector.multi_reduction <add>, %18, %cst_10 [0] : vector<1x8x128xf32> to vector<8x128xf32>
      %20 = arith.addf %17, %19 : vector<8x128xf32>
      %c0_11 = arith.constant 0 : index
      %c0_12 = arith.constant 0 : index
      %c0_13 = arith.constant 0 : index
      %21 = vector.load %arg4[%c0_11, %c0_12, %c0_13] : memref<1x8x128xf32, #tpu.memory_space<vmem>>, vector<1x8x128xf32>
      %22 = vector.shape_cast %21 : vector<1x8x128xf32> to vector<8x128xf32>
      %23 = vector.shape_cast %20 : vector<8x128xf32> to vector<1x8x128xf32>
      tpu.vector_store %arg4[%c0_11, %c0_12, %c0_13], %23 {strides = array<i32>} : memref<1x8x128xf32, #tpu.memory_space<vmem>>, vector<1x8x128xf32>,
    } else {
    }
    return
  }
  func.func @transform_0(%arg0: i32, %arg1: i32) -> (i32, i32) {
    %c1_i32 = arith.constant 1 : i32
    %0 = arith.muli %arg0, %c1_i32 : i32
    %1 = arith.addi %0, %arg1 : i32
    %c0_i32 = arith.constant 0 : i32
    %2 = arith.minsi %1, %c0_i32 : i32
    %c0_i32_0 = arith.constant 0 : i32
    %c0_i32_1 = arith.constant 0 : i32
    return %2, %c0_i32_0 : i32, i32
  }
  func.func @transform_1(%arg0: i32, %arg1: i32) -> (i32, i32) {
    %c1_i32 = arith.constant 1 : i32
    %0 = arith.muli %arg0, %c1_i32 : i32
    %1 = arith.addi %0, %arg1 : i32
    %c0_i32 = arith.constant 0 : i32
    %2 = arith.minsi %1, %c0_i32 : i32
    %c0_i32_0 = arith.constant 0 : i32
    %c0_i32_1 = arith.constant 0 : i32
    return %2, %c0_i32_0 : i32, i32
  }
  func.func @transform_2(%arg0: i32, %arg1: i32) -> (i32, i32, i32) {
    %c0_i32 = arith.constant 0 : i32
    %c0_i32_0 = arith.constant 0 : i32
    %c0_i32_1 = arith.constant 0 : i32
    return %arg0, %c0_i32, %c0_i32_0 : i32, i32, i32
  }
}

</mosaic_0001>

<llo_original>
// kernel: modified_mse_loss.1
$region0: #{modified_mse_loss.1}
  #allocation0 [shape = 'u32[]', space=smem, size = 0x4, offset = 0x4, fixed_abs, tag = 'smem constant byte address 0x4 - core index']
  #allocation1 [shape = 'u32[144,128]{1,0:T(1,128)}', space=vmem, size = 0x12000, scoped, tag = 'internal scratch']
  %s0 = inlined_call_operand.vmem [shape: f32[8,128], index: 0, kind: input, shape index: {}]
  %s1 = inlined_call_operand.vmem [shape: f32[8,128], index: 1, kind: input, shape index: {}]
  %s2 = inlined_call_operand.vmem [shape: f32[1,8,128], index: 2, kind: output, shape index: {}]
  %s3 = sld [smem:[#allocation0]]
  $region26: #{modified_mse_loss.1} parent=0
    _
  %s5 = ssub.s32 1, %s3
  %s6 = scalar_select 0, %s5, %s3
  // Predicated region
  $region2: #{modified_mse_loss.1} parent=0 // pred_check
    _
  $region3: #{modified_mse_loss.1} parent=0 // pred_check_branch
    %8 = sbr.rel (0) target = $region5
  $region4: #{modified_mse_loss.1} parent=0 // pred_region
    %s9 = sadd.s32 0, 0
    %p10 = scmp.lt.s32.totalorder %s9, 0
    %s11 = scalar_select %p10, %s9, 0
    %p12 = scmp.lt.s32.totalorder %s11, 0
    %s13 = scalar_select %p12, %s11, 0
    %s14 = smul.addr %s13, 8
    %s15 = scalar_lea.vmem %s0, %s14
    %s16 = sadd.s32 0, 0
    %p17 = scmp.lt.s32.totalorder %s16, 0
    %s18 = scalar_select %p17, %s16, 0
  $region5: #{modified_mse_loss.1} parent=0 // pred_fallthru
    _
  // Predicated region
  $region6: #{modified_mse_loss.1} parent=0 // pred_check
    _
  $region7: #{modified_mse_loss.1} parent=0 // pred_check_branch
    %20 = sbr.rel (0) target = $region9
  $region8: #{modified_mse_loss.1} parent=0 // pred_region
    %s21 = sadd.s32 0, 0
    %p22 = scmp.lt.s32.totalorder %s21, 0
    %s23 = scalar_select %p22, %s21, 0
    %p24 = scmp.lt.s32.totalorder %s23, 0
    %s25 = scalar_select %p24, %s23, 0
    %s26 = smul.addr %s25, 8
    %s27 = scalar_lea.vmem %s1, %s26
    %s28 = sadd.s32 0, 0
    %p29 = scmp.lt.s32.totalorder %s28, 0
    %s30 = scalar_select %p29, %s28, 0
  $region9: #{modified_mse_loss.1} parent=0 // pred_fallthru
    _
  %s31 = sadd.s32 0, 0
  %p32 = scmp.lt.s32.totalorder %s31, 0
  %s33 = scalar_select %p32, %s31, 0
  %p34 = scmp.lt.s32.totalorder %s33, 0
  %s35 = scalar_select %p34, %s33, 0
  %s36 = smul.addr %s35, 8
  %s37 = scalar_lea.vmem %s0, %s36
  %s38 = sadd.s32 0, 0
  %p39 = scmp.lt.s32.totalorder %s38, 0
  %s40 = scalar_select %p39, %s38, 0
  %p41 = scmp.lt.s32.totalorder %s40, 0
  %s42 = scalar_select %p41, %s40, 0
  %s43 = smul.addr %s42, 8
  %s44 = scalar_lea.vmem %s1, %s43
  %s45 = sadd.s32 0, 0
  %p46 = scmp.lt.s32.totalorder %s45, 0
  %s47 = scalar_select %p46, %s45, 0
  %p48 = scmp.lt.s32.totalorder %s47, 0
  %s49 = scalar_select %p48, %s47, 0
  %s50 = smul.addr %s49, 8
  %s51 = scalar_lea.vmem %s0, %s50
  %s52 = sadd.s32 0, 0
  %p53 = scmp.lt.s32.totalorder %s52, 0
  %s54 = scalar_select %p53, %s52, 0
  %s55 = sadd.s32 0, 0
  %p56 = scmp.lt.s32.totalorder %s55, 0
  %s57 = scalar_select %p56, %s55, 0
  %p58 = scmp.lt.s32.totalorder %s57, 0
  %s59 = scalar_select %p58, %s57, 0
  %s60 = smul.addr %s59, 8
  %s61 = scalar_lea.vmem %s1, %s60
  %s62 = sadd.s32 0, 0
  %p63 = scmp.lt.s32.totalorder %s62, 0
  %s64 = scalar_select %p63, %s62, 0
  %s65 = sadd.s32 0, 0
  %p66 = scmp.eq.s32.totalorder 0, 0
  // Predicated region
  $region10: #{modified_mse_loss.1} parent=0 // pred_check
    %p67 = pneg %p66
  $region11: #{modified_mse_loss.1} parent=0 // pred_check_branch
    %69 = sbr.rel (%p67) target = $region13
  $region12: #{modified_mse_loss.1} parent=0 // pred_region
    %70 = vst [vmem:[%s2] sm:$0xff] 0.0
  $region13: #{modified_mse_loss.1} parent=0 // pred_fallthru
    _
  %v71 = vld [vmem:[%s51] sm:$0xff]
  %v72 = vld [vmem:[%s61] sm:$0xff]
  %vm73 = vcmp.ge.f32.partialorder %v72, 1000000.0
  %v74 = vsub.f32 %v71, %v72
  %v75 = vsel %vm73, 0.0, %v74
  %v76 = vmul.f32 %v75, %v75
  %p77 = scmp.lt.s32.totalorder %s65, 1
  // Predicated region
  $region14: #{modified_mse_loss.1} parent=0 // pred_check
    %p78 = pneg %p77
  $region15: #{modified_mse_loss.1} parent=0 // pred_check_branch
    %80 = sbr.rel (%p78) target = $region17
  $region16: #{modified_mse_loss.1} parent=0 // pred_region
    %v81 = vld [vmem:[%s2] sm:$0xff]
    %v82 = vadd.f32 %v76, 0.0
    %v83 = vadd.f32 %v81, %v82
    %84 = vst [vmem:[%s2] sm:$0xff] %v83
  $region17: #{modified_mse_loss.1} parent=0 // pred_fallthru
    _
  // Predicated region
  $region18: #{modified_mse_loss.1} parent=0 // pred_check
    _
  $region19: #{modified_mse_loss.1} parent=0 // pred_check_branch
    %86 = sbr.rel (0) target = $region21
  $region20: #{modified_mse_loss.1} parent=0 // pred_region
    _
  $region21: #{modified_mse_loss.1} parent=0 // pred_fallthru
    _
  // Predicated region
  $region22: #{modified_mse_loss.1} parent=0 // pred_check
    _
  $region23: #{modified_mse_loss.1} parent=0 // pred_check_branch
    %88 = sbr.rel (0) target = $region25
  $region24: #{modified_mse_loss.1} parent=0 // pred_region
    _
  $region25: #{modified_mse_loss.1} parent=0 // pred_fallthru
    _

</llo_original>
